<compile_context>
chip_gen: v7x
topology: tpu7x:2x2x1
jax: 0.10.0
libtpu: 0.0.40
codegen_flags: <defaults>
</compile_context>

<pallas_src>
import functools

import jax
import jax.numpy as jnp
from jax.experimental import pallas as pl
from jax.experimental.pallas import tpu as pltpu

LANE = 128


def _subdivision_fwd_kernel(centers_ref, rays_ref, cent_ref, depth_ref, idx_ref,
                            *, num_centers, radius2, chunk):
    # rays_ref : [6, TG, 128] VMEM  (rows: ox, oy, oz, dx, dy, dz)
    # cent_ref : [3, TG, 128] VMEM  (selected center xyz, 0 on miss)
    # depth_ref: [TG, 128]    VMEM  (closest-approach t, 0 on miss)
    # idx_ref  : [TG, 128]    VMEM  int32 (center index, -1 on miss)
    # centers_ref: [3*M] SMEM scalars ([x0..xM-1, y0..yM-1, z0..zM-1])
    M = num_centers

    # Hoist the 3*M SMEM scalar reads above the strip-mined loop.
    cxs = [centers_ref[m] for m in range(M)]
    cys = [centers_ref[M + m] for m in range(M)]
    czs = [centers_ref[2 * M + m] for m in range(M)]

    n_chunks = rays_ref.shape[1] // chunk

    @pl.loop(0, n_chunks)
    def _(s):
        row = pl.multiple_of(s * chunk, chunk)
        sl = pl.ds(row, chunk)

        ox = rays_ref[0, sl, :]
        oy = rays_ref[1, sl, :]
        oz = rays_ref[2, sl, :]
        dx = rays_ref[3, sl, :]
        dy = rays_ref[4, sl, :]
        dz = rays_ref[5, sl, :]

        dd = dx * dx + dy * dy + dz * dz                    # [chunk, 128]
        od = ox * dx + oy * dy + oz * dz
        # EUP approximate reciprocal (free slot); clamp protects zero-padded rays.
        inv_dd = pl.reciprocal(jnp.maximum(dd, jnp.float32(1e-20)), approx=True)

        zeros = jnp.zeros_like(dd)
        best_d = jnp.full_like(dd, jnp.inf)
        best_t = zeros
        best_i = jnp.full(dd.shape, -1, dtype=jnp.int32)
        best_cx = zeros
        best_cy = zeros
        best_cz = zeros

        # Statically unrolled over the (few) subdivision-cell centers: pure VPU
        # broadcast-FMA + compare/select, gather fused into the running argmin.
        for m in range(M):
            cx, cy, cz = cxs[m], cys[m], czs[m]
            cd = cx * dx + cy * dy + cz * dz
            t = (cd - od) * inv_dd                          # closest-approach param
            # TODO(synk): no t >= 0 clamp -- matches the synthetic closest-approach
            # semantics standing in for the abstract intersect().
            px = ox + t * dx - cx
            py = oy + t * dy - cy
            pz = oz + t * dz - cz
            dist2 = px * px + py * py + pz * pz             # robust fused form
            better = dist2 < best_d                         # first-occurrence ties
            best_d = jnp.where(better, dist2, best_d)
            best_t = jnp.where(better, t, best_t)
            best_i = jnp.where(better, jnp.int32(m), best_i)
            best_cx = jnp.where(better, cx, best_cx)
            best_cy = jnp.where(better, cy, best_cy)
            best_cz = jnp.where(better, cz, best_cz)

        valid = best_d <= jnp.float32(radius2)

        # Only the selected centers / depth / idx go back to HBM; the rays
        # passthrough half of the cat() is rebuilt in the wrapper.
        cent_ref[0, sl, :] = jnp.where(valid, best_cx, zeros)
        cent_ref[1, sl, :] = jnp.where(valid, best_cy, zeros)
        cent_ref[2, sl, :] = jnp.where(valid, best_cz, zeros)
        depth_ref[sl, :] = jnp.where(valid, best_t, zeros)
        idx_ref[sl, :] = jnp.where(valid, best_i, jnp.int32(-1))


@functools.partial(jax.jit, static_argnames=("radius", "rows_per_tile", "chunk"))
def subdivision_forward(rays, centers, *, radius=0.75, rows_per_tile=512, chunk=8):
    """Pallas implementation of Subdivision.forward with a synthetic intersect.

    rays:    [N, 6] float32 (origin xyz, direction xyz)
    centers: [M, 3] float32 subdivision-cell centers
    Returns: cat [N, 9], depth [N, 1], idx [N] int32, miss_mask [N] bool.
    """
    N, rdim = rays.shape
    M, cdim = centers.shape
    assert rdim == 6 and cdim == 3

    # ---- tile selection: rays along (sublane, lane) = (G, 128) -----------------
    G = pl.cdiv(N, LANE)
    if G <= 2 * chunk:
        tg = max(G, 1)              # single full-extent block (exempt from (8,128) rule)
        chunk_eff = tg
        G = tg
    else:
        rpt = max(chunk, (rows_per_tile // chunk) * chunk)
        n_steps = max(2, pl.cdiv(G, rpt))      # >=2 steps so v7x megacore can engage
        tg = pl.cdiv(pl.cdiv(G, n_steps), chunk) * chunk
        G = pl.cdiv(G, tg) * tg
        chunk_eff = chunk
    n_pad = G * LANE

    # ---- layout plumbing (fused with surrounding ops under this jit) ------------
    rays_f32 = rays.astype(jnp.float32)
    rays_t = jnp.transpose(rays_f32)                         # [6, N]  SoA
    if n_pad != N:
        rays_t = jnp.pad(rays_t, ((0, 0), (0, n_pad - N)))
    rays_t3 = rays_t.reshape(6, G, LANE)

    # Centers as flat SMEM scalars: [x0..xM-1, y0..yM-1, z0..zM-1].
    centers_flat = jnp.transpose(centers.astype(jnp.float32)).reshape(-1)

    kernel = functools.partial(_subdivision_fwd_kernel, num_centers=M,
                               radius2=float(radius) ** 2, chunk=chunk_eff)

    cost = pl.CostEstimate(
        flops=(16 + 25 * M) * n_pad,
        transcendentals=n_pad,
        bytes_accessed=44 * n_pad + 12 * M,
    )

    cent3, depth2, idx2 = pl.pallas_call(
        kernel,
        out_shape=(
            jax.ShapeDtypeStruct((3, G, LANE), jnp.float32),   # selected centers
            jax.ShapeDtypeStruct((G, LANE), jnp.float32),      # depth
            jax.ShapeDtypeStruct((G, LANE), jnp.int32),        # idx
        ),
        grid=(G // tg,),
        in_specs=[
            pl.BlockSpec(memory_space=pltpu.MemorySpace.SMEM),  # centers (scalars)
            pl.BlockSpec((6, tg, LANE), lambda i: (0, i, 0)),   # rays tile
        ],
        out_specs=(
            pl.BlockSpec((3, tg, LANE), lambda i: (0, i, 0)),
            pl.BlockSpec((tg, LANE), lambda i: (i, 0)),
            pl.BlockSpec((tg, LANE), lambda i: (i, 0)),
        ),
        compiler_params=pltpu.CompilerParams(
            dimension_semantics=("parallel",)),
        cost_estimate=cost,
    )(centers_flat, rays_t3)

    # Module-facing (AoS, channels-last) API.  cat([isect_rays, isect_centers], -1)
    # is rebuilt here from the original rays so the kernel never writes those rows.
    cent_sel = jnp.transpose(cent3.reshape(3, n_pad)[:, :N])     # [N, 3]
    cat = jnp.concatenate([rays_f32, cent_sel], axis=-1)         # [N, 9]
    depth = depth2.reshape(n_pad)[:N][:, None]                   # [N, 1]
    isect_idx = idx2.reshape(n_pad)[:N]                          # [N] int32
    isect_mask = isect_idx == -1                                 # idx.eq(-1)
    return cat, depth, isect_idx, isect_mask


if __name__ == "__main__":
    key = jax.random.PRNGKey(0)

    def run_case(case_key, N, M, radius=0.75):
        k_o, k_d, k_c = jax.random.split(case_key, 3)
        origins = jax.random.uniform(k_o, (N, 3), jnp.float32, minval=-1.0, maxval=1.0)
        dirs = jax.random.normal(k_d, (N, 3), jnp.float32)
        dirs = dirs / jnp.linalg.norm(dirs, axis=-1, keepdims=True)
        rays = jnp.concatenate([origins, dirs], axis=-1)                    # [N, 6]
        centers = jax.random.uniform(k_c, (M, 3), jnp.float32, minval=-1.0, maxval=1.0)

        cat, depth, isect_idx, miss_mask = subdivision_forward(rays, centers, radius=radius)
        jax.block_until_ready((cat, depth, isect_idx, miss_mask))

        # Sanity / internal-consistency checks.
        assert cat.shape == (N, 9) and depth.shape == (N, 1)
        assert isect_idx.shape == (N,) and miss_mask.shape == (N,)
        assert isect_idx.dtype == jnp.int32
        assert bool(jnp.all(jnp.isfinite(cat))) and bool(jnp.all(jnp.isfinite(depth)))
        assert bool(jnp.all(miss_mask == (isect_idx == -1)))
        # Rays pass through unchanged into the first 6 channels of the cat output.
        assert bool(jnp.all(cat[:, :6] == rays))
        # Hit rays carry exactly the chosen center; misses carry zeros and zero depth.
        hit = ~miss_mask
        sel = jnp.where(hit[:, None], centers[jnp.clip(isect_idx, 0, M - 1)], 0.0)
        assert bool(jnp.all(cat[:, 6:9] == sel))
        assert bool(jnp.all(jnp.where(hit, True, depth[:, 0] == 0.0)))
        # Depth matches the closest-approach parameter for the selected center
        # (loose tolerance covers pl.reciprocal(approx=True)).
        o, d = rays[:, :3], rays[:, 3:]
        cd = jnp.sum(sel * d, -1)
        od = jnp.sum(o * d, -1)
        dd = jnp.sum(d * d, -1)
        t_ref = (cd - od) / dd
        ok = jnp.where(hit,
                       jnp.abs(depth[:, 0] - t_ref) <= 3e-2 * (1.0 + jnp.abs(t_ref)),
                       True)
        assert bool(jnp.all(ok))

    k1, k2 = jax.random.split(key)
    run_case(k1, N=256, M=8)    # small: single full-extent block path
    run_case(k2, N=2176, M=8)   # multi-step grid + strip-mined inner-chunk path

    # TODO(synk): `intersect`/`process_intersect` are abstract in the PyTorch base
    # class; the nearest-center intersection here is a deterministic synthetic stand-in.
    print("KERNEL_OK")
</pallas_src>

<mosaic_0001>
module attributes {stable_mosaic.version = 11 : i64} {
  func.func @_subdivision_fwd_kernel(%arg0: i32, %arg1: memref<24xf32, #tpu.memory_space<smem>>, %arg2: memref<6x2x128xf32, #tpu.memory_space<vmem>>, %arg3: memref<3x2x128xf32, #tpu.memory_space<vmem>>, %arg4: memref<2x128xf32, #tpu.memory_space<vmem>>, %arg5: memref<2x128xi32, #tpu.memory_space<vmem>>) attributes {dimension_semantics = [#tpu.dimension_semantics<parallel>], iteration_bounds = array<i64: 1>, scalar_prefetch = 0 : i64, scratch_operands = 0 : i64, tpu.core_type = #tpu.core_type<tc>, window_params = [{transform_indices = @transform_0, window_bounds = array<i64: 24>}, {transform_indices = @transform_1, window_bounds = array<i64: 6, 2, 128>}, {transform_indices = @transform_2, window_bounds = array<i64: 3, 2, 128>}, {transform_indices = @transform_3, window_bounds = array<i64: 2, 128>}, {transform_indices = @transform_4, window_bounds = array<i64: 2, 128>}]} {
    %c0 = arith.constant 0 : index
    %0 = memref.load %arg1[%c0] : memref<24xf32, #tpu.memory_space<smem>>
    %c1 = arith.constant 1 : index
    %1 = memref.load %arg1[%c1] : memref<24xf32, #tpu.memory_space<smem>>
    %c2 = arith.constant 2 : index
    %2 = memref.load %arg1[%c2] : memref<24xf32, #tpu.memory_space<smem>>
    %c3 = arith.constant 3 : index
    %3 = memref.load %arg1[%c3] : memref<24xf32, #tpu.memory_space<smem>>
    %c4 = arith.constant 4 : index
    %4 = memref.load %arg1[%c4] : memref<24xf32, #tpu.memory_space<smem>>
    %c5 = arith.constant 5 : index
    %5 = memref.load %arg1[%c5] : memref<24xf32, #tpu.memory_space<smem>>
    %c6 = arith.constant 6 : index
    %6 = memref.load %arg1[%c6] : memref<24xf32, #tpu.memory_space<smem>>
    %c7 = arith.constant 7 : index
    %7 = memref.load %arg1[%c7] : memref<24xf32, #tpu.memory_space<smem>>
    %c8 = arith.constant 8 : index
    %8 = memref.load %arg1[%c8] : memref<24xf32, #tpu.memory_space<smem>>
    %c9 = arith.constant 9 : index
    %9 = memref.load %arg1[%c9] : memref<24xf32, #tpu.memory_space<smem>>
    %c10 = arith.constant 10 : index
    %10 = memref.load %arg1[%c10] : memref<24xf32, #tpu.memory_space<smem>>
    %c11 = arith.constant 11 : index
    %11 = memref.load %arg1[%c11] : memref<24xf32, #tpu.memory_space<smem>>
    %c12 = arith.constant 12 : index
    %12 = memref.load %arg1[%c12] : memref<24xf32, #tpu.memory_space<smem>>
    %c13 = arith.constant 13 : index
    %13 = memref.load %arg1[%c13] : memref<24xf32, #tpu.memory_space<smem>>
    %c14 = arith.constant 14 : index
    %14 = memref.load %arg1[%c14] : memref<24xf32, #tpu.memory_space<smem>>
    %c15 = arith.constant 15 : index
    %15 = memref.load %arg1[%c15] : memref<24xf32, #tpu.memory_space<smem>>
    %c16 = arith.constant 16 : index
    %16 = memref.load %arg1[%c16] : memref<24xf32, #tpu.memory_space<smem>>
    %c17 = arith.constant 17 : index
    %17 = memref.load %arg1[%c17] : memref<24xf32, #tpu.memory_space<smem>>
    %c18 = arith.constant 18 : index
    %18 = memref.load %arg1[%c18] : memref<24xf32, #tpu.memory_space<smem>>
    %c19 = arith.constant 19 : index
    %19 = memref.load %arg1[%c19] : memref<24xf32, #tpu.memory_space<smem>>
    %c20 = arith.constant 20 : index
    %20 = memref.load %arg1[%c20] : memref<24xf32, #tpu.memory_space<smem>>
    %c21 = arith.constant 21 : index
    %21 = memref.load %arg1[%c21] : memref<24xf32, #tpu.memory_space<smem>>
    %c22 = arith.constant 22 : index
    %22 = memref.load %arg1[%c22] : memref<24xf32, #tpu.memory_space<smem>>
    %c23 = arith.constant 23 : index
    %23 = memref.load %arg1[%c23] : memref<24xf32, #tpu.memory_space<smem>>
    %c0_i32 = arith.constant 0 : i32
    %c1_i32 = arith.constant 1 : i32
    %24 = arith.muli %c0_i32, %c1_i32 : i32
    %c0_i32_0 = arith.constant 0 : i32
    %25 = arith.addi %c0_i32_0, %24 : i32
    %c2_i32 = arith.constant 2 : i32
    %26 = arith.muli %25, %c2_i32 : i32
    %27 = tpu.assume_multiple %26, 2 : i32
    %c0_1 = arith.constant 0 : index
    %28 = arith.index_cast %27 : i32 to index
    %c0_2 = arith.constant 0 : index
    %29 = vector.load %arg2[%c0_1, %28, %c0_2] : memref<6x2x128xf32, #tpu.memory_space<vmem>>, vector<1x2x128xf32>
    %30 = vector.shape_cast %29 : vector<1x2x128xf32> to vector<2x128xf32>
    %c1_3 = arith.constant 1 : index
    %31 = arith.index_cast %27 : i32 to index
    %c0_4 = arith.constant 0 : index
    %32 = vector.load %arg2[%c1_3, %31, %c0_4] : memref<6x2x128xf32, #tpu.memory_space<vmem>>, vector<1x2x128xf32>
    %33 = vector.shape_cast %32 : vector<1x2x128xf32> to vector<2x128xf32>
    %c2_5 = arith.constant 2 : index
    %34 = arith.index_cast %27 : i32 to index
    %c0_6 = arith.constant 0 : index
    %35 = vector.load %arg2[%c2_5, %34, %c0_6] : memref<6x2x128xf32, #tpu.memory_space<vmem>>, vector<1x2x128xf32>
    %36 = vector.shape_cast %35 : vector<1x2x128xf32> to vector<2x128xf32>
    %c3_7 = arith.constant 3 : index
    %37 = arith.index_cast %27 : i32 to index
    %c0_8 = arith.constant 0 : index
    %38 = vector.load %arg2[%c3_7, %37, %c0_8] : memref<6x2x128xf32, #tpu.memory_space<vmem>>, vector<1x2x128xf32>
    %39 = vector.shape_cast %38 : vector<1x2x128xf32> to vector<2x128xf32>
    %c4_9 = arith.constant 4 : index
    %40 = arith.index_cast %27 : i32 to index
    %c0_10 = arith.constant 0 : index
    %41 = vector.load %arg2[%c4_9, %40, %c0_10] : memref<6x2x128xf32, #tpu.memory_space<vmem>>, vector<1x2x128xf32>
    %42 = vector.shape_cast %41 : vector<1x2x128xf32> to vector<2x128xf32>
    %c5_11 = arith.constant 5 : index
    %43 = arith.index_cast %27 : i32 to index
    %c0_12 = arith.constant 0 : index
    %44 = vector.load %arg2[%c5_11, %43, %c0_12] : memref<6x2x128xf32, #tpu.memory_space<vmem>>, vector<1x2x128xf32>
    %45 = vector.shape_cast %44 : vector<1x2x128xf32> to vector<2x128xf32>
    %46 = arith.mulf %39, %39 : vector<2x128xf32>
    %47 = arith.mulf %42, %42 : vector<2x128xf32>
    %48 = arith.addf %46, %47 : vector<2x128xf32>
    %49 = arith.mulf %45, %45 : vector<2x128xf32>
    %50 = arith.addf %48, %49 : vector<2x128xf32>
    %51 = arith.mulf %30, %39 : vector<2x128xf32>
    %52 = arith.mulf %33, %42 : vector<2x128xf32>
    %53 = arith.addf %51, %52 : vector<2x128xf32>
    %54 = arith.mulf %36, %45 : vector<2x128xf32>
    %55 = arith.addf %53, %54 : vector<2x128xf32>
    %cst = arith.constant 9.99999968E-21 : f32
    %56 = vector.broadcast %cst : f32 to vector<2x128xf32>
    %57 = arith.maximumf %50, %56 : vector<2x128xf32>
    %58 = tpu.reciprocal %57 {approx = true} : vector<2x128xf32> -> vector<2x128xf32>
    %cst_13 = arith.constant 0.000000e+00 : f32
    %59 = vector.broadcast %cst_13 : f32 to vector<2x128xf32>
    %cst_14 = arith.constant 0x7F800000 : f32
    %60 = vector.broadcast %cst_14 : f32 to vector<2x128xf32>
    %c-1_i32 = arith.constant -1 : i32
    %61 = vector.broadcast %c-1_i32 : i32 to vector<2x128xi32>
    %62 = vector.broadcast %0 : f32 to vector<2x128xf32>
    %63 = arith.mulf %62, %39 : vector<2x128xf32>
    %64 = vector.broadcast %8 : f32 to vector<2x128xf32>
    %65 = arith.mulf %64, %42 : vector<2x128xf32>
    %66 = arith.addf %63, %65 : vector<2x128xf32>
    %67 = vector.broadcast %16 : f32 to vector<2x128xf32>
    %68 = arith.mulf %67, %45 : vector<2x128xf32>
    %69 = arith.addf %66, %68 : vector<2x128xf32>
    %70 = arith.subf %69, %55 : vector<2x128xf32>
    %71 = arith.mulf %70, %58 : vector<2x128xf32>
    %72 = arith.mulf %71, %39 : vector<2x128xf32>
    %73 = arith.addf %30, %72 : vector<2x128xf32>
    %74 = vector.broadcast %0 : f32 to vector<2x128xf32>
    %75 = arith.subf %73, %74 : vector<2x128xf32>
    %76 = arith.mulf %71, %42 : vector<2x128xf32>
    %77 = arith.addf %33, %76 : vector<2x128xf32>
    %78 = vector.broadcast %8 : f32 to vector<2x128xf32>
    %79 = arith.subf %77, %78 : vector<2x128xf32>
    %80 = arith.mulf %71, %45 : vector<2x128xf32>
    %81 = arith.addf %36, %80 : vector<2x128xf32>
    %82 = vector.broadcast %16 : f32 to vector<2x128xf32>
    %83 = arith.subf %81, %82 : vector<2x128xf32>
    %84 = arith.mulf %75, %75 : vector<2x128xf32>
    %85 = arith.mulf %79, %79 : vector<2x128xf32>
    %86 = arith.addf %84, %85 : vector<2x128xf32>
    %87 = arith.mulf %83, %83 : vector<2x128xf32>
    %88 = arith.addf %86, %87 : vector<2x128xf32>
    %89 = arith.cmpf olt, %88, %60 : vector<2x128xf32>
    %90 = arith.select %89, %88, %60 : vector<2x128xi1>, vector<2x128xf32>
    %91 = arith.select %89, %71, %59 : vector<2x128xi1>, vector<2x128xf32>
    %c0_i32_15 = arith.constant 0 : i32
    %92 = vector.broadcast %c0_i32_15 : i32 to vector<2x128xi32>
    %93 = arith.select %89, %92, %61 : vector<2x128xi1>, vector<2x128xi32>
    %94 = vector.broadcast %0 : f32 to vector<2x128xf32>
    %95 = arith.select %89, %94, %59 : vector<2x128xi1>, vector<2x128xf32>
    %96 = vector.broadcast %8 : f32 to vector<2x128xf32>
    %97 = arith.select %89, %96, %59 : vector<2x128xi1>, vector<2x128xf32>
    %98 = vector.broadcast %16 : f32 to vector<2x128xf32>
    %99 = arith.select %89, %98, %59 : vector<2x128xi1>, vector<2x128xf32>
    %100 = vector.broadcast %1 : f32 to vector<2x128xf32>
    %101 = arith.mulf %100, %39 : vector<2x128xf32>
    %102 = vector.broadcast %9 : f32 to vector<2x128xf32>
    %103 = arith.mulf %102, %42 : vector<2x128xf32>
    %104 = arith.addf %101, %103 : vector<2x128xf32>
    %105 = vector.broadcast %17 : f32 to vector<2x128xf32>
    %106 = arith.mulf %105, %45 : vector<2x128xf32>
    %107 = arith.addf %104, %106 : vector<2x128xf32>
    %108 = arith.subf %107, %55 : vector<2x128xf32>
    %109 = arith.mulf %108, %58 : vector<2x128xf32>
    %110 = arith.mulf %109, %39 : vector<2x128xf32>
    %111 = arith.addf %30, %110 : vector<2x128xf32>
    %112 = vector.broadcast %1 : f32 to vector<2x128xf32>
    %113 = arith.subf %111, %112 : vector<2x128xf32>
    %114 = arith.mulf %109, %42 : vector<2x128xf32>
    %115 = arith.addf %33, %114 : vector<2x128xf32>
    %116 = vector.broadcast %9 : f32 to vector<2x128xf32>
    %117 = arith.subf %115, %116 : vector<2x128xf32>
    %118 = arith.mulf %109, %45 : vector<2x128xf32>
    %119 = arith.addf %36, %118 : vector<2x128xf32>
    %120 = vector.broadcast %17 : f32 to vector<2x128xf32>
    %121 = arith.subf %119, %120 : vector<2x128xf32>
    %122 = arith.mulf %113, %113 : vector<2x128xf32>
    %123 = arith.mulf %117, %117 : vector<2x128xf32>
    %124 = arith.addf %122, %123 : vector<2x128xf32>
    %125 = arith.mulf %121, %121 : vector<2x128xf32>
    %126 = arith.addf %124, %125 : vector<2x128xf32>
    %127 = arith.cmpf olt, %126, %90 : vector<2x128xf32>
    %128 = arith.select %127, %126, %90 : vector<2x128xi1>, vector<2x128xf32>
    %129 = arith.select %127, %109, %91 : vector<2x128xi1>, vector<2x128xf32>
    %c1_i32_16 = arith.constant 1 : i32
    %130 = vector.broadcast %c1_i32_16 : i32 to vector<2x128xi32>
    %131 = arith.select %127, %130, %93 : vector<2x128xi1>, vector<2x128xi32>
    %132 = vector.broadcast %1 : f32 to vector<2x128xf32>
    %133 = arith.select %127, %132, %95 : vector<2x128xi1>, vector<2x128xf32>
    %134 = vector.broadcast %9 : f32 to vector<2x128xf32>
    %135 = arith.select %127, %134, %97 : vector<2x128xi1>, vector<2x128xf32>
    %136 = vector.broadcast %17 : f32 to vector<2x128xf32>
    %137 = arith.select %127, %136, %99 : vector<2x128xi1>, vector<2x128xf32>
    %138 = vector.broadcast %2 : f32 to vector<2x128xf32>
    %139 = arith.mulf %138, %39 : vector<2x128xf32>
    %140 = vector.broadcast %10 : f32 to vector<2x128xf32>
    %141 = arith.mulf %140, %42 : vector<2x128xf32>
    %142 = arith.addf %139, %141 : vector<2x128xf32>
    %143 = vector.broadcast %18 : f32 to vector<2x128xf32>
    %144 = arith.mulf %143, %45 : vector<2x128xf32>
    %145 = arith.addf %142, %144 : vector<2x128xf32>
    %146 = arith.subf %145, %55 : vector<2x128xf32>
    %147 = arith.mulf %146, %58 : vector<2x128xf32>
    %148 = arith.mulf %147, %39 : vector<2x128xf32>
    %149 = arith.addf %30, %148 : vector<2x128xf32>
    %150 = vector.broadcast %2 : f32 to vector<2x128xf32>
    %151 = arith.subf %149, %150 : vector<2x128xf32>
    %152 = arith.mulf %147, %42 : vector<2x128xf32>
    %153 = arith.addf %33, %152 : vector<2x128xf32>
    %154 = vector.broadcast %10 : f32 to vector<2x128xf32>
    %155 = arith.subf %153, %154 : vector<2x128xf32>
    %156 = arith.mulf %147, %45 : vector<2x128xf32>
    %157 = arith.addf %36, %156 : vector<2x128xf32>
    %158 = vector.broadcast %18 : f32 to vector<2x128xf32>
    %159 = arith.subf %157, %158 : vector<2x128xf32>
    %160 = arith.mulf %151, %151 : vector<2x128xf32>
    %161 = arith.mulf %155, %155 : vector<2x128xf32>
    %162 = arith.addf %160, %161 : vector<2x128xf32>
    %163 = arith.mulf %159, %159 : vector<2x128xf32>
    %164 = arith.addf %162, %163 : vector<2x128xf32>
    %165 = arith.cmpf olt, %164, %128 : vector<2x128xf32>
    %166 = arith.select %165, %164, %128 : vector<2x128xi1>, vector<2x128xf32>
    %167 = arith.select %165, %147, %129 : vector<2x128xi1>, vector<2x128xf32>
    %c2_i32_17 = arith.constant 2 : i32
    %168 = vector.broadcast %c2_i32_17 : i32 to vector<2x128xi32>
    %169 = arith.select %165, %168, %131 : vector<2x128xi1>, vector<2x128xi32>
    %170 = vector.broadcast %2 : f32 to vector<2x128xf32>
    %171 = arith.select %165, %170, %133 : vector<2x128xi1>, vector<2x128xf32>
    %172 = vector.broadcast %10 : f32 to vector<2x128xf32>
    %173 = arith.select %165, %172, %135 : vector<2x128xi1>, vector<2x128xf32>
    %174 = vector.broadcast %18 : f32 to vector<2x128xf32>
    %175 = arith.select %165, %174, %137 : vector<2x128xi1>, vector<2x128xf32>
    %176 = vector.broadcast %3 : f32 to vector<2x128xf32>
    %177 = arith.mulf %176, %39 : vector<2x128xf32>
    %178 = vector.broadcast %11 : f32 to vector<2x128xf32>
    %179 = arith.mulf %178, %42 : vector<2x128xf32>
    %180 = arith.addf %177, %179 : vector<2x128xf32>
    %181 = vector.broadcast %19 : f32 to vector<2x128xf32>
    %182 = arith.mulf %181, %45 : vector<2x128xf32>
    %183 = arith.addf %180, %182 : vector<2x128xf32>
    %184 = arith.subf %183, %55 : vector<2x128xf32>
    %185 = arith.mulf %184, %58 : vector<2x128xf32>
    %186 = arith.mulf %185, %39 : vector<2x128xf32>
    %187 = arith.addf %30, %186 : vector<2x128xf32>
    %188 = vector.broadcast %3 : f32 to vector<2x128xf32>
    %189 = arith.subf %187, %188 : vector<2x128xf32>
    %190 = arith.mulf %185, %42 : vector<2x128xf32>
    %191 = arith.addf %33, %190 : vector<2x128xf32>
    %192 = vector.broadcast %11 : f32 to vector<2x128xf32>
    %193 = arith.subf %191, %192 : vector<2x128xf32>
    %194 = arith.mulf %185, %45 : vector<2x128xf32>
    %195 = arith.addf %36, %194 : vector<2x128xf32>
    %196 = vector.broadcast %19 : f32 to vector<2x128xf32>
    %197 = arith.subf %195, %196 : vector<2x128xf32>
    %198 = arith.mulf %189, %189 : vector<2x128xf32>
    %199 = arith.mulf %193, %193 : vector<2x128xf32>
    %200 = arith.addf %198, %199 : vector<2x128xf32>
    %201 = arith.mulf %197, %197 : vector<2x128xf32>
    %202 = arith.addf %200, %201 : vector<2x128xf32>
    %203 = arith.cmpf olt, %202, %166 : vector<2x128xf32>
    %204 = arith.select %203, %202, %166 : vector<2x128xi1>, vector<2x128xf32>
    %205 = arith.select %203, %185, %167 : vector<2x128xi1>, vector<2x128xf32>
    %c3_i32 = arith.constant 3 : i32
    %206 = vector.broadcast %c3_i32 : i32 to vector<2x128xi32>
    %207 = arith.select %203, %206, %169 : vector<2x128xi1>, vector<2x128xi32>
    %208 = vector.broadcast %3 : f32 to vector<2x128xf32>
    %209 = arith.select %203, %208, %171 : vector<2x128xi1>, vector<2x128xf32>
    %210 = vector.broadcast %11 : f32 to vector<2x128xf32>
    %211 = arith.select %203, %210, %173 : vector<2x128xi1>, vector<2x128xf32>
    %212 = vector.broadcast %19 : f32 to vector<2x128xf32>
    %213 = arith.select %203, %212, %175 : vector<2x128xi1>, vector<2x128xf32>
    %214 = vector.broadcast %4 : f32 to vector<2x128xf32>
    %215 = arith.mulf %214, %39 : vector<2x128xf32>
    %216 = vector.broadcast %12 : f32 to vector<2x128xf32>
    %217 = arith.mulf %216, %42 : vector<2x128xf32>
    %218 = arith.addf %215, %217 : vector<2x128xf32>
    %219 = vector.broadcast %20 : f32 to vector<2x128xf32>
    %220 = arith.mulf %219, %45 : vector<2x128xf32>
    %221 = arith.addf %218, %220 : vector<2x128xf32>
    %222 = arith.subf %221, %55 : vector<2x128xf32>
    %223 = arith.mulf %222, %58 : vector<2x128xf32>
    %224 = arith.mulf %223, %39 : vector<2x128xf32>
    %225 = arith.addf %30, %224 : vector<2x128xf32>
    %226 = vector.broadcast %4 : f32 to vector<2x128xf32>
    %227 = arith.subf %225, %226 : vector<2x128xf32>
    %228 = arith.mulf %223, %42 : vector<2x128xf32>
    %229 = arith.addf %33, %228 : vector<2x128xf32>
    %230 = vector.broadcast %12 : f32 to vector<2x128xf32>
    %231 = arith.subf %229, %230 : vector<2x128xf32>
    %232 = arith.mulf %223, %45 : vector<2x128xf32>
    %233 = arith.addf %36, %232 : vector<2x128xf32>
    %234 = vector.broadcast %20 : f32 to vector<2x128xf32>
    %235 = arith.subf %233, %234 : vector<2x128xf32>
    %236 = arith.mulf %227, %227 : vector<2x128xf32>
    %237 = arith.mulf %231, %231 : vector<2x128xf32>
    %238 = arith.addf %236, %237 : vector<2x128xf32>
    %239 = arith.mulf %235, %235 : vector<2x128xf32>
    %240 = arith.addf %238, %239 : vector<2x128xf32>
    %241 = arith.cmpf olt, %240, %204 : vector<2x128xf32>
    %242 = arith.select %241, %240, %204 : vector<2x128xi1>, vector<2x128xf32>
    %243 = arith.select %241, %223, %205 : vector<2x128xi1>, vector<2x128xf32>
    %c4_i32 = arith.constant 4 : i32
    %244 = vector.broadcast %c4_i32 : i32 to vector<2x128xi32>
    %245 = arith.select %241, %244, %207 : vector<2x128xi1>, vector<2x128xi32>
    %246 = vector.broadcast %4 : f32 to vector<2x128xf32>
    %247 = arith.select %241, %246, %209 : vector<2x128xi1>, vector<2x128xf32>
    %248 = vector.broadcast %12 : f32 to vector<2x128xf32>
    %249 = arith.select %241, %248, %211 : vector<2x128xi1>, vector<2x128xf32>
    %250 = vector.broadcast %20 : f32 to vector<2x128xf32>
    %251 = arith.select %241, %250, %213 : vector<2x128xi1>, vector<2x128xf32>
    %252 = vector.broadcast %5 : f32 to vector<2x128xf32>
    %253 = arith.mulf %252, %39 : vector<2x128xf32>
    %254 = vector.broadcast %13 : f32 to vector<2x128xf32>
    %255 = arith.mulf %254, %42 : vector<2x128xf32>
    %256 = arith.addf %253, %255 : vector<2x128xf32>
    %257 = vector.broadcast %21 : f32 to vector<2x128xf32>
    %258 = arith.mulf %257, %45 : vector<2x128xf32>
    %259 = arith.addf %256, %258 : vector<2x128xf32>
    %260 = arith.subf %259, %55 : vector<2x128xf32>
    %261 = arith.mulf %260, %58 : vector<2x128xf32>
    %262 = arith.mulf %261, %39 : vector<2x128xf32>
    %263 = arith.addf %30, %262 : vector<2x128xf32>
    %264 = vector.broadcast %5 : f32 to vector<2x128xf32>
    %265 = arith.subf %263, %264 : vector<2x128xf32>
    %266 = arith.mulf %261, %42 : vector<2x128xf32>
    %267 = arith.addf %33, %266 : vector<2x128xf32>
    %268 = vector.broadcast %13 : f32 to vector<2x128xf32>
    %269 = arith.subf %267, %268 : vector<2x128xf32>
    %270 = arith.mulf %261, %45 : vector<2x128xf32>
    %271 = arith.addf %36, %270 : vector<2x128xf32>
    %272 = vector.broadcast %21 : f32 to vector<2x128xf32>
    %273 = arith.subf %271, %272 : vector<2x128xf32>
    %274 = arith.mulf %265, %265 : vector<2x128xf32>
    %275 = arith.mulf %269, %269 : vector<2x128xf32>
    %276 = arith.addf %274, %275 : vector<2x128xf32>
    %277 = arith.mulf %273, %273 : vector<2x128xf32>
    %278 = arith.addf %276, %277 : vector<2x128xf32>
    %279 = arith.cmpf olt, %278, %242 : vector<2x128xf32>
    %280 = arith.select %279, %278, %242 : vector<2x128xi1>, vector<2x128xf32>
    %281 = arith.select %279, %261, %243 : vector<2x128xi1>, vector<2x128xf32>
    %c5_i32 = arith.constant 5 : i32
    %282 = vector.broadcast %c5_i32 : i32 to vector<2x128xi32>
    %283 = arith.select %279, %282, %245 : vector<2x128xi1>, vector<2x128xi32>
    %284 = vector.broadcast %5 : f32 to vector<2x128xf32>
    %285 = arith.select %279, %284, %247 : vector<2x128xi1>, vector<2x128xf32>
    %286 = vector.broadcast %13 : f32 to vector<2x128xf32>
    %287 = arith.select %279, %286, %249 : vector<2x128xi1>, vector<2x128xf32>
    %288 = vector.broadcast %21 : f32 to vector<2x128xf32>
    %289 = arith.select %279, %288, %251 : vector<2x128xi1>, vector<2x128xf32>
    %290 = vector.broadcast %6 : f32 to vector<2x128xf32>
    %291 = arith.mulf %290, %39 : vector<2x128xf32>
    %292 = vector.broadcast %14 : f32 to vector<2x128xf32>
    %293 = arith.mulf %292, %42 : vector<2x128xf32>
    %294 = arith.addf %291, %293 : vector<2x128xf32>
    %295 = vector.broadcast %22 : f32 to vector<2x128xf32>
    %296 = arith.mulf %295, %45 : vector<2x128xf32>
    %297 = arith.addf %294, %296 : vector<2x128xf32>
    %298 = arith.subf %297, %55 : vector<2x128xf32>
    %299 = arith.mulf %298, %58 : vector<2x128xf32>
    %300 = arith.mulf %299, %39 : vector<2x128xf32>
    %301 = arith.addf %30, %300 : vector<2x128xf32>
    %302 = vector.broadcast %6 : f32 to vector<2x128xf32>
    %303 = arith.subf %301, %302 : vector<2x128xf32>
    %304 = arith.mulf %299, %42 : vector<2x128xf32>
    %305 = arith.addf %33, %304 : vector<2x128xf32>
    %306 = vector.broadcast %14 : f32 to vector<2x128xf32>
    %307 = arith.subf %305, %306 : vector<2x128xf32>
    %308 = arith.mulf %299, %45 : vector<2x128xf32>
    %309 = arith.addf %36, %308 : vector<2x128xf32>
    %310 = vector.broadcast %22 : f32 to vector<2x128xf32>
    %311 = arith.subf %309, %310 : vector<2x128xf32>
    %312 = arith.mulf %303, %303 : vector<2x128xf32>
    %313 = arith.mulf %307, %307 : vector<2x128xf32>
    %314 = arith.addf %312, %313 : vector<2x128xf32>
    %315 = arith.mulf %311, %311 : vector<2x128xf32>
    %316 = arith.addf %314, %315 : vector<2x128xf32>
    %317 = arith.cmpf olt, %316, %280 : vector<2x128xf32>
    %318 = arith.select %317, %316, %280 : vector<2x128xi1>, vector<2x128xf32>
    %319 = arith.select %317, %299, %281 : vector<2x128xi1>, vector<2x128xf32>
    %c6_i32 = arith.constant 6 : i32
    %320 = vector.broadcast %c6_i32 : i32 to vector<2x128xi32>
    %321 = arith.select %317, %320, %283 : vector<2x128xi1>, vector<2x128xi32>
    %322 = vector.broadcast %6 : f32 to vector<2x128xf32>
    %323 = arith.select %317, %322, %285 : vector<2x128xi1>, vector<2x128xf32>
    %324 = vector.broadcast %14 : f32 to vector<2x128xf32>
    %325 = arith.select %317, %324, %287 : vector<2x128xi1>, vector<2x128xf32>
    %326 = vector.broadcast %22 : f32 to vector<2x128xf32>
    %327 = arith.select %317, %326, %289 : vector<2x128xi1>, vector<2x128xf32>
    %328 = vector.broadcast %7 : f32 to vector<2x128xf32>
    %329 = arith.mulf %328, %39 : vector<2x128xf32>
    %330 = vector.broadcast %15 : f32 to vector<2x128xf32>
    %331 = arith.mulf %330, %42 : vector<2x128xf32>
    %332 = arith.addf %329, %331 : vector<2x128xf32>
    %333 = vector.broadcast %23 : f32 to vector<2x128xf32>
    %334 = arith.mulf %333, %45 : vector<2x128xf32>
    %335 = arith.addf %332, %334 : vector<2x128xf32>
    %336 = arith.subf %335, %55 : vector<2x128xf32>
    %337 = arith.mulf %336, %58 : vector<2x128xf32>
    %338 = arith.mulf %337, %39 : vector<2x128xf32>
    %339 = arith.addf %30, %338 : vector<2x128xf32>
    %340 = vector.broadcast %7 : f32 to vector<2x128xf32>
    %341 = arith.subf %339, %340 : vector<2x128xf32>
    %342 = arith.mulf %337, %42 : vector<2x128xf32>
    %343 = arith.addf %33, %342 : vector<2x128xf32>
    %344 = vector.broadcast %15 : f32 to vector<2x128xf32>
    %345 = arith.subf %343, %344 : vector<2x128xf32>
    %346 = arith.mulf %337, %45 : vector<2x128xf32>
    %347 = arith.addf %36, %346 : vector<2x128xf32>
    %348 = vector.broadcast %23 : f32 to vector<2x128xf32>
    %349 = arith.subf %347, %348 : vector<2x128xf32>
    %350 = arith.mulf %341, %341 : vector<2x128xf32>
    %351 = arith.mulf %345, %345 : vector<2x128xf32>
    %352 = arith.addf %350, %351 : vector<2x128xf32>
    %353 = arith.mulf %349, %349 : vector<2x128xf32>
    %354 = arith.addf %352, %353 : vector<2x128xf32>
    %355 = arith.cmpf olt, %354, %318 : vector<2x128xf32>
    %356 = arith.select %355, %354, %318 : vector<2x128xi1>, vector<2x128xf32>
    %357 = arith.select %355, %337, %319 : vector<2x128xi1>, vector<2x128xf32>
    %c7_i32 = arith.constant 7 : i32
    %358 = vector.broadcast %c7_i32 : i32 to vector<2x128xi32>
    %359 = arith.select %355, %358, %321 : vector<2x128xi1>, vector<2x128xi32>
    %360 = vector.broadcast %7 : f32 to vector<2x128xf32>
    %361 = arith.select %355, %360, %323 : vector<2x128xi1>, vector<2x128xf32>
    %362 = vector.broadcast %15 : f32 to vector<2x128xf32>
    %363 = arith.select %355, %362, %325 : vector<2x128xi1>, vector<2x128xf32>
    %364 = vector.broadcast %23 : f32 to vector<2x128xf32>
    %365 = arith.select %355, %364, %327 : vector<2x128xi1>, vector<2x128xf32>
    %cst_18 = arith.constant 5.625000e-01 : f32
    %366 = vector.broadcast %cst_18 : f32 to vector<2x128xf32>
    %367 = arith.cmpf ole, %356, %366 : vector<2x128xf32>
    %368 = arith.select %367, %361, %59 : vector<2x128xi1>, vector<2x128xf32>
    %c0_19 = arith.constant 0 : index
    %369 = arith.index_cast %27 : i32 to index
    %c0_20 = arith.constant 0 : index
    %370 = vector.load %arg3[%c0_19, %369, %c0_20] : memref<3x2x128xf32, #tpu.memory_space<vmem>>, vector<1x2x128xf32>
    %371 = vector.shape_cast %370 : vector<1x2x128xf32> to vector<2x128xf32>
    %372 = vector.shape_cast %368 : vector<2x128xf32> to vector<1x2x128xf32>
    tpu.vector_store %arg3[%c0_19, %369, %c0_20], %372 {strides = array<i32>} : memref<3x2x128xf32, #tpu.memory_space<vmem>>, vector<1x2x128xf32>,
    %373 = arith.select %367, %363, %59 : vector<2x128xi1>, vector<2x128xf32>
    %c1_21 = arith.constant 1 : index
    %374 = arith.index_cast %27 : i32 to index
    %c0_22 = arith.constant 0 : index
    %375 = vector.load %arg3[%c1_21, %374, %c0_22] : memref<3x2x128xf32, #tpu.memory_space<vmem>>, vector<1x2x128xf32>
    %376 = vector.shape_cast %375 : vector<1x2x128xf32> to vector<2x128xf32>
    %377 = vector.shape_cast %373 : vector<2x128xf32> to vector<1x2x128xf32>
    tpu.vector_store %arg3[%c1_21, %374, %c0_22], %377 {strides = array<i32>} : memref<3x2x128xf32, #tpu.memory_space<vmem>>, vector<1x2x128xf32>,
    %378 = arith.select %367, %365, %59 : vector<2x128xi1>, vector<2x128xf32>
    %c2_23 = arith.constant 2 : index
    %379 = arith.index_cast %27 : i32 to index
    %c0_24 = arith.constant 0 : index
    %380 = vector.load %arg3[%c2_23, %379, %c0_24] : memref<3x2x128xf32, #tpu.memory_space<vmem>>, vector<1x2x128xf32>
    %381 = vector.shape_cast %380 : vector<1x2x128xf32> to vector<2x128xf32>
    %382 = vector.shape_cast %378 : vector<2x128xf32> to vector<1x2x128xf32>
    tpu.vector_store %arg3[%c2_23, %379, %c0_24], %382 {strides = array<i32>} : memref<3x2x128xf32, #tpu.memory_space<vmem>>, vector<1x2x128xf32>,
    %383 = arith.select %367, %357, %59 : vector<2x128xi1>, vector<2x128xf32>
    %384 = arith.index_cast %27 : i32 to index
    %c0_25 = arith.constant 0 : index
    %385 = vector.load %arg4[%384, %c0_25] : memref<2x128xf32, #tpu.memory_space<vmem>>, vector<2x128xf32>
    tpu.vector_store %arg4[%384, %c0_25], %383 {strides = array<i32>} : memref<2x128xf32, #tpu.memory_space<vmem>>, vector<2x128xf32>,
    %c-1_i32_26 = arith.constant -1 : i32
    %386 = vector.broadcast %c-1_i32_26 : i32 to vector<2x128xi32>
    %387 = arith.select %367, %359, %386 : vector<2x128xi1>, vector<2x128xi32>
    %388 = arith.index_cast %27 : i32 to index
    %c0_27 = arith.constant 0 : index
    %389 = vector.load %arg5[%388, %c0_27] : memref<2x128xi32, #tpu.memory_space<vmem>>, vector<2x128xi32>
    tpu.vector_store %arg5[%388, %c0_27], %387 {strides = array<i32>} : memref<2x128xi32, #tpu.memory_space<vmem>>, vector<2x128xi32>,
    %c1_i32_28 = arith.constant 1 : i32
    return
  }
  func.func @transform_0(%arg0: i32) -> i32 {
    %c0_i32 = arith.constant 0 : i32
    %c0_i32_0 = arith.constant 0 : i32
    return %c0_i32 : i32
  }
  func.func @transform_1(%arg0: i32) -> (i32, i32, i32) {
    %c0_i32 = arith.constant 0 : i32
    %c0_i32_0 = arith.constant 0 : i32
    %c0_i32_1 = arith.constant 0 : i32
    return %c0_i32, %arg0, %c0_i32_0 : i32, i32, i32
  }
  func.func @transform_2(%arg0: i32) -> (i32, i32, i32) {
    %c0_i32 = arith.constant 0 : i32
    %c0_i32_0 = arith.constant 0 : i32
    %c0_i32_1 = arith.constant 0 : i32
    return %c0_i32, %arg0, %c0_i32_0 : i32, i32, i32
  }
  func.func @transform_3(%arg0: i32) -> (i32, i32) {
    %c0_i32 = arith.constant 0 : i32
    %c0_i32_0 = arith.constant 0 : i32
    return %arg0, %c0_i32 : i32, i32
  }
  func.func @transform_4(%arg0: i32) -> (i32, i32) {
    %c0_i32 = arith.constant 0 : i32
    %c0_i32_0 = arith.constant 0 : i32
    return %arg0, %c0_i32 : i32, i32
  }
}

</mosaic_0001>

<llo_original>
// kernel: subdivision_forward.1
$region0: #{subdivision_forward.1}
  #allocation0 [shape = 'u32[]', space=smem, size = 0x4, offset = 0x4, fixed_abs, tag = 'smem constant byte address 0x4 - core index']
  #allocation1 [shape = 'u32[144,128]{1,0:T(1,128)}', space=vmem, size = 0x12000, scoped, tag = 'internal scratch']
  %s0 = inlined_call_operand.vmem [shape: f32[24], index: 0, kind: input, shape index: {}]
  %s1 = inlined_call_operand.vmem [shape: f32[6,2,128], index: 1, kind: input, shape index: {}]
  %s2 = inlined_call_operand.vmem [shape: f32[3,2,128], index: 2, kind: output, shape index: {0}]
  %s3 = inlined_call_operand.hbm [shape: f32[2,128], index: 3, kind: output, shape index: {1}]
  %s4 = inlined_call_operand.vmem [shape: s32[2,128], index: 4, kind: output, shape index: {2}]
  %5 = xla_tuple %s2, %s3, %s4
  %s6 = sld [smem:[#allocation0]]
  $region38: #{subdivision_forward.1} parent=0
    _
  %s8 = ssub.s32 1, %s6
  %s9 = scalar_select 0, %s8, %s6
  $region1: #{subdivision_forward.1} parent=0
    #allocation2 [shape = 'u8[512]{0}', space=smem, size = 0x200, scoped, tag = 'input window, operand 0, single buffered']
    #allocation3 [shape = 's32[1]{0}', space=sflag, size = 0x4, scoped, tag = 'scoped memory for subdivision_forward.1']
    #allocation4 [shape = 's32[1]{0}', space=sflag, size = 0x4, scoped, tag = 'scoped memory for subdivision_forward.1']
    #allocation5 [shape = 'u8[1024]{0}', space=vmem, size = 0x400, scoped, tag = 'output window, operand 1, single buffered']
    %10 = vsyncpa [#allocation4], 0
    %11 = vsyncpa [#allocation3], 0
    // Predicated region
    $region2: #{subdivision_forward.1} parent=1 // pred_check
      _
    $region3: #{subdivision_forward.1} parent=1 // pred_check_branch
      %13 = sbr.rel (0) target = $region5
    $region4: #{subdivision_forward.1} parent=1 // pred_region
      %s15 = ssub.s32 16, 16
      %16 = vsyncadd [#allocation4], %s15
      %s18 = sshll.u32 %s0, 4
      %s19 = int_to_ptr.vmem [resolvable:$true] %s18
      %21 = dma.vmem_to_smem %s19, 16, [#allocation2], [#allocation4]
    $region5: #{subdivision_forward.1} parent=1 // pred_fallthru
      _
    // Predicated region
    $region6: #{subdivision_forward.1} parent=1 // pred_check
      _
    $region7: #{subdivision_forward.1} parent=1 // pred_check_branch
      %23 = sbr.rel (0) target = $region9
    $region8: #{subdivision_forward.1} parent=1 // pred_region
      _
    $region9: #{subdivision_forward.1} parent=1 // pred_fallthru
      _
    // Predicated region
    $region10: #{subdivision_forward.1} parent=1 // pred_check
      _
    $region11: #{subdivision_forward.1} parent=1 // pred_check_branch
      %25 = sbr.rel (0) target = $region13
    $region12: #{subdivision_forward.1} parent=1 // pred_region
      %26 = dma.done [#allocation4], 16
    $region13: #{subdivision_forward.1} parent=1 // pred_fallthru
      _
    %27 = sfence
    %s28 = sld [smem:[#allocation2]]
    %s29 = sld [smem:[#allocation2 + $0x1]]
    %s30 = sld [smem:[#allocation2 + $0x2]]
    %s31 = sld [smem:[#allocation2 + $0x3]]
    %s32 = sld [smem:[#allocation2 + $0x4]]
    %s33 = sld [smem:[#allocation2 + $0x5]]
    %s34 = sld [smem:[#allocation2 + $0x6]]
    %s35 = sld [smem:[#allocation2 + $0x7]]
    %s36 = sld [smem:[#allocation2 + $0x8]]
    %s37 = sld [smem:[#allocation2 + $0x9]]
    %s38 = sld [smem:[#allocation2 + $0xa]]
    %s39 = sld [smem:[#allocation2 + $0xb]]
    %s40 = sld [smem:[#allocation2 + $0xc]]
    %s41 = sld [smem:[#allocation2 + $0xd]]
    %s42 = sld [smem:[#allocation2 + $0xe]]
    %s43 = sld [smem:[#allocation2 + $0xf]]
    %s44 = sld [smem:[#allocation2 + $0x10]]
    %s45 = sld [smem:[#allocation2 + $0x11]]
    %s46 = sld [smem:[#allocation2 + $0x12]]
    %s47 = sld [smem:[#allocation2 + $0x13]]
    %s48 = sld [smem:[#allocation2 + $0x14]]
    %s49 = sld [smem:[#allocation2 + $0x15]]
    %s50 = sld [smem:[#allocation2 + $0x16]]
    %s51 = sld [smem:[#allocation2 + $0x17]]
    %v52 = vld [vmem:[%s1] sm:$0x3]
    %s53 = sadd.s32 0, 2
    %s54 = scalar_lea.vmem %s1, %s53
    %v55 = vld [vmem:[%s54] sm:$0x3]
    %s56 = sadd.s32 0, 4
    %s57 = scalar_lea.vmem %s1, %s56
    %v58 = vld [vmem:[%s57] sm:$0x3]
    %s59 = sadd.s32 0, 6
    %s60 = scalar_lea.vmem %s1, %s59
    %v61 = vld [vmem:[%s60] sm:$0x3]
    %s62 = sadd.s32 0, 8
    %s63 = scalar_lea.vmem %s1, %s62
    %v64 = vld [vmem:[%s63] sm:$0x3]
    %s65 = sadd.s32 0, 10
    %s66 = scalar_lea.vmem %s1, %s65
    %v67 = vld [vmem:[%s66] sm:$0x3]
    %v68 = vmul.f32 %v61, %v61
    %v69 = vmul.f32 %v64, %v64
    %v70 = vadd.f32 %v68, %v69
    %v71 = vmul.f32 %v67, %v67
    %v72 = vadd.f32 %v70, %v71
    %v73 = vmul.f32 %v52, %v61
    %v74 = vmul.f32 %v55, %v64
    %v75 = vadd.f32 %v73, %v74
    %v76 = vmul.f32 %v58, %v67
    %v77 = vadd.f32 %v75, %v76
    %v78 = vmax.f32 %v72, 1e-20
    %v79 = vrcp.pop %v78
    %v80 = vstv %s28
    %v81 = vmul.f32 %v80, %v61
    %v82 = vstv %s36
    %v83 = vmul.f32 %v82, %v64
    %v84 = vadd.f32 %v81, %v83
    %v85 = vstv %s44
    %v86 = vmul.f32 %v85, %v67
    %v87 = vadd.f32 %v84, %v86
    %v88 = vsub.f32 %v87, %v77
    %v89 = vmul.f32 %v88, %v79
    %v90 = vmul.f32 %v89, %v61
    %v91 = vadd.f32 %v52, %v90
    %v92 = vsub.f32 %v91, %v80
    %v93 = vmul.f32 %v89, %v64
    %v94 = vadd.f32 %v55, %v93
    %v95 = vsub.f32 %v94, %v82
    %v96 = vmul.f32 %v89, %v67
    %v97 = vadd.f32 %v58, %v96
    %v98 = vsub.f32 %v97, %v85
    %v99 = vmul.f32 %v92, %v92
    %v100 = vmul.f32 %v95, %v95
    %v101 = vadd.f32 %v99, %v100
    %v102 = vmul.f32 %v98, %v98
    %v103 = vadd.f32 %v101, %v102
    %vm104 = vcmp.lt.f32.partialorder %v103, inf
    %v105 = vsel %vm104, %v103, inf
    %v106 = vsel %vm104, %v89, 0.0
    %v107 = vsel %vm104, 0, 4294967295
    %v108 = vsel %vm104, %v80, 0.0
    %v109 = vsel %vm104, %v82, 0.0
    %v110 = vsel %vm104, %v85, 0.0
    %v111 = vstv %s29
    %v112 = vmul.f32 %v111, %v61
    %v113 = vstv %s37
    %v114 = vmul.f32 %v113, %v64
    %v115 = vadd.f32 %v112, %v114
    %v116 = vstv %s45
    %v117 = vmul.f32 %v116, %v67
    %v118 = vadd.f32 %v115, %v117
    %v119 = vsub.f32 %v118, %v77
    %v120 = vmul.f32 %v119, %v79
    %v121 = vmul.f32 %v120, %v61
    %v122 = vadd.f32 %v52, %v121
    %v123 = vsub.f32 %v122, %v111
    %v124 = vmul.f32 %v120, %v64
    %v125 = vadd.f32 %v55, %v124
    %v126 = vsub.f32 %v125, %v113
    %v127 = vmul.f32 %v120, %v67
    %v128 = vadd.f32 %v58, %v127
    %v129 = vsub.f32 %v128, %v116
    %v130 = vmul.f32 %v123, %v123
    %v131 = vmul.f32 %v126, %v126
    %v132 = vadd.f32 %v130, %v131
    %v133 = vmul.f32 %v129, %v129
    %v134 = vadd.f32 %v132, %v133
    %vm135 = vcmp.lt.f32.partialorder %v134, %v105
    %v136 = vsel %vm135, %v134, %v105
    %v137 = vsel %vm135, %v120, %v106
    %v138 = vsel %vm135, 1, %v107
    %v139 = vsel %vm135, %v111, %v108
    %v140 = vsel %vm135, %v113, %v109
    %v141 = vsel %vm135, %v116, %v110
    %v142 = vstv %s30
    %v143 = vmul.f32 %v142, %v61
    %v144 = vstv %s38
    %v145 = vmul.f32 %v144, %v64
    %v146 = vadd.f32 %v143, %v145
    %v147 = vstv %s46
    %v148 = vmul.f32 %v147, %v67
    %v149 = vadd.f32 %v146, %v148
    %v150 = vsub.f32 %v149, %v77
    %v151 = vmul.f32 %v150, %v79
    %v152 = vmul.f32 %v151, %v61
    %v153 = vadd.f32 %v52, %v152
    %v154 = vsub.f32 %v153, %v142
    %v155 = vmul.f32 %v151, %v64
    %v156 = vadd.f32 %v55, %v155
    %v157 = vsub.f32 %v156, %v144
    %v158 = vmul.f32 %v151, %v67
    %v159 = vadd.f32 %v58, %v158
    %v160 = vsub.f32 %v159, %v147
    %v161 = vmul.f32 %v154, %v154
    %v162 = vmul.f32 %v157, %v157
    %v163 = vadd.f32 %v161, %v162
    %v164 = vmul.f32 %v160, %v160
    %v165 = vadd.f32 %v163, %v164
    %vm166 = vcmp.lt.f32.partialorder %v165, %v136
    %v167 = vsel %vm166, %v165, %v136
    %v168 = vsel %vm166, %v151, %v137
    %v169 = vsel %vm166, 2, %v138
    %v170 = vsel %vm166, %v142, %v139
    %v171 = vsel %vm166, %v144, %v140
    %v172 = vsel %vm166, %v147, %v141
    %v173 = vstv %s31
    %v174 = vmul.f32 %v173, %v61
    %v175 = vstv %s39
    %v176 = vmul.f32 %v175, %v64
    %v177 = vadd.f32 %v174, %v176
    %v178 = vstv %s47
    %v179 = vmul.f32 %v178, %v67
    %v180 = vadd.f32 %v177, %v179
    %v181 = vsub.f32 %v180, %v77
    %v182 = vmul.f32 %v181, %v79
    %v183 = vmul.f32 %v182, %v61
    %v184 = vadd.f32 %v52, %v183
    %v185 = vsub.f32 %v184, %v173
    %v186 = vmul.f32 %v182, %v64
    %v187 = vadd.f32 %v55, %v186
    %v188 = vsub.f32 %v187, %v175
    %v189 = vmul.f32 %v182, %v67
    %v190 = vadd.f32 %v58, %v189
    %v191 = vsub.f32 %v190, %v178
    %v192 = vmul.f32 %v185, %v185
    %v193 = vmul.f32 %v188, %v188
    %v194 = vadd.f32 %v192, %v193
    %v195 = vmul.f32 %v191, %v191
    %v196 = vadd.f32 %v194, %v195
    %vm197 = vcmp.lt.f32.partialorder %v196, %v167
    %v198 = vsel %vm197, %v196, %v167
    %v199 = vsel %vm197, %v182, %v168
    %v200 = vsel %vm197, 3, %v169
    %v201 = vsel %vm197, %v173, %v170
    %v202 = vsel %vm197, %v175, %v171
    %v203 = vsel %vm197, %v178, %v172
    %v204 = vstv %s32
    %v205 = vmul.f32 %v204, %v61
    %v206 = vstv %s40
    %v207 = vmul.f32 %v206, %v64
    %v208 = vadd.f32 %v205, %v207
    %v209 = vstv %s48
    %v210 = vmul.f32 %v209, %v67
    %v211 = vadd.f32 %v208, %v210
    %v212 = vsub.f32 %v211, %v77
    %v213 = vmul.f32 %v212, %v79
    %v214 = vmul.f32 %v213, %v61
    %v215 = vadd.f32 %v52, %v214
    %v216 = vsub.f32 %v215, %v204
    %v217 = vmul.f32 %v213, %v64
    %v218 = vadd.f32 %v55, %v217
    %v219 = vsub.f32 %v218, %v206
    %v220 = vmul.f32 %v213, %v67
    %v221 = vadd.f32 %v58, %v220
    %v222 = vsub.f32 %v221, %v209
    %v223 = vmul.f32 %v216, %v216
    %v224 = vmul.f32 %v219, %v219
    %v225 = vadd.f32 %v223, %v224
    %v226 = vmul.f32 %v222, %v222
    %v227 = vadd.f32 %v225, %v226
    %vm228 = vcmp.lt.f32.partialorder %v227, %v198
    %v229 = vsel %vm228, %v227, %v198
    %v230 = vsel %vm228, %v213, %v199
    %v231 = vsel %vm228, 4, %v200
    %v232 = vsel %vm228, %v204, %v201
    %v233 = vsel %vm228, %v206, %v202
    %v234 = vsel %vm228, %v209, %v203
    %v235 = vstv %s33
    %v236 = vmul.f32 %v235, %v61
    %v237 = vstv %s41
    %v238 = vmul.f32 %v237, %v64
    %v239 = vadd.f32 %v236, %v238
    %v240 = vstv %s49
    %v241 = vmul.f32 %v240, %v67
    %v242 = vadd.f32 %v239, %v241
    %v243 = vsub.f32 %v242, %v77
    %v244 = vmul.f32 %v243, %v79
    %v245 = vmul.f32 %v244, %v61
    %v246 = vadd.f32 %v52, %v245
    %v247 = vsub.f32 %v246, %v235
    %v248 = vmul.f32 %v244, %v64
    %v249 = vadd.f32 %v55, %v248
    %v250 = vsub.f32 %v249, %v237
    %v251 = vmul.f32 %v244, %v67
    %v252 = vadd.f32 %v58, %v251
    %v253 = vsub.f32 %v252, %v240
    %v254 = vmul.f32 %v247, %v247
    %v255 = vmul.f32 %v250, %v250
    %v256 = vadd.f32 %v254, %v255
    %v257 = vmul.f32 %v253, %v253
    %v258 = vadd.f32 %v256, %v257
    %vm259 = vcmp.lt.f32.partialorder %v258, %v229
    %v260 = vsel %vm259, %v258, %v229
    %v261 = vsel %vm259, %v244, %v230
    %v262 = vsel %vm259, 5, %v231
    %v263 = vsel %vm259, %v235, %v232
    %v264 = vsel %vm259, %v237, %v233
    %v265 = vsel %vm259, %v240, %v234
    %v266 = vstv %s34
    %v267 = vmul.f32 %v266, %v61
    %v268 = vstv %s42
    %v269 = vmul.f32 %v268, %v64
    %v270 = vadd.f32 %v267, %v269
    %v271 = vstv %s50
    %v272 = vmul.f32 %v271, %v67
    %v273 = vadd.f32 %v270, %v272
    %v274 = vsub.f32 %v273, %v77
    %v275 = vmul.f32 %v274, %v79
    %v276 = vmul.f32 %v275, %v61
    %v277 = vadd.f32 %v52, %v276
    %v278 = vsub.f32 %v277, %v266
    %v279 = vmul.f32 %v275, %v64
    %v280 = vadd.f32 %v55, %v279
    %v281 = vsub.f32 %v280, %v268
    %v282 = vmul.f32 %v275, %v67
    %v283 = vadd.f32 %v58, %v282
    %v284 = vsub.f32 %v283, %v271
    %v285 = vmul.f32 %v278, %v278
    %v286 = vmul.f32 %v281, %v281
    %v287 = vadd.f32 %v285, %v286
    %v288 = vmul.f32 %v284, %v284
    %v289 = vadd.f32 %v287, %v288
    %vm290 = vcmp.lt.f32.partialorder %v289, %v260
    %v291 = vsel %vm290, %v289, %v260
    %v292 = vsel %vm290, %v275, %v261
    %v293 = vsel %vm290, 6, %v262
    %v294 = vsel %vm290, %v266, %v263
    %v295 = vsel %vm290, %v268, %v264
    %v296 = vsel %vm290, %v271, %v265
    %v297 = vstv %s35
    %v298 = vmul.f32 %v297, %v61
    %v299 = vstv %s43
    %v300 = vmul.f32 %v299, %v64
    %v301 = vadd.f32 %v298, %v300
    %v302 = vstv %s51
    %v303 = vmul.f32 %v302, %v67
    %v304 = vadd.f32 %v301, %v303
    %v305 = vsub.f32 %v304, %v77
    %v306 = vmul.f32 %v305, %v79
    %v307 = vmul.f32 %v306, %v61
    %v308 = vadd.f32 %v52, %v307
    %v309 = vsub.f32 %v308, %v297
    %v310 = vmul.f32 %v306, %v64
    %v311 = vadd.f32 %v55, %v310
    %v312 = vsub.f32 %v311, %v299
    %v313 = vmul.f32 %v306, %v67
    %v314 = vadd.f32 %v58, %v313
    %v315 = vsub.f32 %v314, %v302
    %v316 = vmul.f32 %v309, %v309
    %v317 = vmul.f32 %v312, %v312
    %v318 = vadd.f32 %v316, %v317
    %v319 = vmul.f32 %v315, %v315
    %v320 = vadd.f32 %v318, %v319
    %vm321 = vcmp.lt.f32.partialorder %v320, %v291
    %v322 = vsel %vm321, %v320, %v291
    %v323 = vsel %vm321, %v306, %v292
    %v324 = vsel %vm321, 7, %v293
    %v325 = vsel %vm321, %v297, %v294
    %v326 = vsel %vm321, %v299, %v295
    %v327 = vsel %vm321, %v302, %v296
    %vm328 = vcmp.le.f32.partialorder %v322, 0.5625
    %v329 = vsel %vm328, %v325, 0.0
    %330 = vst [vmem:[%s2] sm:$0x3] %v329
    %v331 = vsel %vm328, %v326, 0.0
    %s332 = scalar_lea.vmem %s2, %s53
    %333 = vst [vmem:[%s332] sm:$0x3] %v331
    %v334 = vsel %vm328, %v327, 0.0
    %s335 = scalar_lea.vmem %s2, %s56
    %336 = vst [vmem:[%s335] sm:$0x3] %v334
    %v337 = vsel %vm328, %v323, 0.0
    %338 = vst [vmem:[#allocation5] sm:$0x3] %v337
    %v339 = vsel %vm328, %v324, 4294967295
    %340 = vst [vmem:[%s4] sm:$0x3] %v339
    // Predicated region
    $region14: #{subdivision_forward.1} parent=1 // pred_check
      _
    $region15: #{subdivision_forward.1} parent=1 // pred_check_branch
      %342 = sbr.rel (0) target = $region17
    $region16: #{subdivision_forward.1} parent=1 // pred_region
      _
    $region17: #{subdivision_forward.1} parent=1 // pred_fallthru
      _
    // Predicated region
    $region18: #{subdivision_forward.1} parent=1 // pred_check
      _
    $region19: #{subdivision_forward.1} parent=1 // pred_check_branch
      %344 = sbr.rel (0) target = $region21
    $region20: #{subdivision_forward.1} parent=1 // pred_region
      %s346 = ssub.s32 32, 32
      %347 = vsyncadd [#allocation3], %s346
      %s349 = sshll.u32 [#allocation5], 4
      %s350 = int_to_ptr.vmem [resolvable:$true] %s349
      %352 = dma.vmem_to_hbm [thread:$0]  %s350, 32, %s3, [#allocation3]
    $region21: #{subdivision_forward.1} parent=1 // pred_fallthru
      _
    // Predicated region
    $region22: #{subdivision_forward.1} parent=1 // pred_check
      _
    $region23: #{subdivision_forward.1} parent=1 // pred_check_branch
      %354 = sbr.rel (0) target = $region25
    $region24: #{subdivision_forward.1} parent=1 // pred_region
      _
    $region25: #{subdivision_forward.1} parent=1 // pred_fallthru
      _
    // Predicated region
    $region26: #{subdivision_forward.1} parent=1 // pred_check
      _
    $region27: #{subdivision_forward.1} parent=1 // pred_check_branch
      %356 = sbr.rel (0) target = $region29
    $region28: #{subdivision_forward.1} parent=1 // pred_region
      _
    $region29: #{subdivision_forward.1} parent=1 // pred_fallthru
      _
    // Predicated region
    $region30: #{subdivision_forward.1} parent=1 // pred_check
      _
    $region31: #{subdivision_forward.1} parent=1 // pred_check_branch
      %358 = sbr.rel (0) target = $region33
    $region32: #{subdivision_forward.1} parent=1 // pred_region
      %359 = dma.done [#allocation3], 32
    $region33: #{subdivision_forward.1} parent=1 // pred_fallthru
      _
    // Predicated region
    $region34: #{subdivision_forward.1} parent=1 // pred_check
      _
    $region35: #{subdivision_forward.1} parent=1 // pred_check_branch
      %361 = sbr.rel (0) target = $region37
    $region36: #{subdivision_forward.1} parent=1 // pred_region
      _
    $region37: #{subdivision_forward.1} parent=1 // pred_fallthru
      _
    %362 = vsyncpa [#allocation3], 1
    %363 = vsyncpa [#allocation4], 1

</llo_original>
